<compile_context>
chip_gen: v7x
topology: tpu7x:2x2x1
jax: 0.10.0
libtpu: 0.0.40
codegen_flags: <defaults>
</compile_context>

<pallas_src>
import functools

import jax
import jax.numpy as jnp
from jax import lax
from jax.experimental import pallas as pl
from jax.experimental.pallas import tpu as pltpu


def _round_up(x: int, m: int) -> int:
    return ((x + m - 1) // m) * m


def ff_kernel(x_ref, w_ref, b_ref, o_ref, acc_ref):
    # x_ref: (tm, tk)   w_ref: (tn, tk)  [PyTorch layout, contract over k]
    # b_ref: (1, tn)    o_ref: (tm, tn)  acc_ref: (tm, tn) f32 scratch
    k = pl.program_id(2)

    @pl.when(k == 0)
    def _():
        acc_ref[...] = jnp.zeros_like(acc_ref)

    # (tm, tk) x (tn, tk) -> (tm, tn), contracting dim 1 of both operands.
    acc_ref[...] += lax.dot_general(
        x_ref[...],
        w_ref[...],
        dimension_numbers=(((1,), (1,)), ((), ())),
        preferred_element_type=jnp.float32,
    )

    @pl.when(k == pl.num_programs(2) - 1)
    def _():
        acc = acc_ref[...] + b_ref[...].astype(jnp.float32)   # bias broadcast
        o_ref[...] = jnp.maximum(acc, 0.0).astype(o_ref.dtype)  # fused ReLU


@functools.partial(jax.jit, static_argnames=("tm", "tn", "tk"))
def feed_forward(x, weight, bias, *, tm=256, tn=512, tk=512):
    """x: (B, S, attn_size); weight: (ff_size, attn_size) [PyTorch layout];
    bias: (ff_size,).  Returns (B, S, ff_size)."""
    B, S, K = x.shape
    N = weight.shape[0]
    M = B * S
    x2d = x.reshape(M, K)

    # Sublane/lane alignment: f32 sublane = 8, bf16 sublane = 16, lane = 128.
    sub = 16 if x.dtype == jnp.bfloat16 else 8

    # Clamp requested tiles to (aligned) full extents so small shapes become
    # a single block instead of a mostly-padded huge tile.
    tm = min(tm, _round_up(M, sub))
    tk = min(tk, _round_up(K, 128))
    tn = min(tn, _round_up(N, 128))

    Mp, Kp, Np = _round_up(M, tm), _round_up(K, tk), _round_up(N, tn)

    # Zero-pad to tile multiples (zeros in K contribute nothing to the matmul;
    # padded M rows / N cols are sliced off below).
    if (Mp, Kp) != (M, K):
        x2d = jnp.pad(x2d, ((0, Mp - M), (0, Kp - K)))
    w = weight
    if (Np, Kp) != (N, K):
        w = jnp.pad(w, ((0, Np - N), (0, Kp - K)))
    b2d = bias.reshape(1, N)
    if Np != N:
        b2d = jnp.pad(b2d, ((0, 0), (0, Np - N)))

    grid = (Mp // tm, Np // tn, Kp // tk)
    itemsize = jnp.dtype(x.dtype).itemsize

    out = pl.pallas_call(
        ff_kernel,
        out_shape=jax.ShapeDtypeStruct((Mp, Np), x.dtype),
        grid_spec=pltpu.PrefetchScalarGridSpec(
            num_scalar_prefetch=0,
            grid=grid,
            in_specs=[
                pl.BlockSpec((tm, tk), lambda i, j, k: (i, k)),   # x tile
                pl.BlockSpec((tn, tk), lambda i, j, k: (j, k)),   # W tile (N, K)
                pl.BlockSpec((1, tn), lambda i, j, k: (0, j)),    # bias tile
            ],
            out_specs=pl.BlockSpec((tm, tn), lambda i, j, k: (i, j)),
            scratch_shapes=[pltpu.VMEM((tm, tn), jnp.float32)],
        ),
        compiler_params=pltpu.CompilerParams(
            dimension_semantics=("parallel", "parallel", "arbitrary"),
            vmem_limit_bytes=32 * 1024 * 1024,
        ),
        cost_estimate=pl.CostEstimate(
            flops=2 * M * N * K,
            transcendentals=0,
            bytes_accessed=(M * K + N * K + N + M * N) * itemsize,
        ),
    )(x2d, w, b2d)

    return out[:M, :N].reshape(B, S, N)


def _reference(x, weight, bias):
    y = jnp.einsum(
        "bsk,nk->bsn", x, weight, precision=lax.Precision.HIGHEST
    ) + bias
    return jnp.maximum(y, 0.0)


if __name__ == "__main__":
    key = jax.random.PRNGKey(0)

    # --- Test 1: small shapes consistent with the module (single block) ---
    batch, seq, attn_size, ff_size = 2, 8, 32, 64
    kx, kw, kb, key = jax.random.split(key, 4)
    bound = 1.0 / (attn_size ** 0.5)   # nn.Linear default init range
    weight = jax.random.uniform(kw, (ff_size, attn_size), jnp.float32, -bound, bound)
    bias = jax.random.uniform(kb, (ff_size,), jnp.float32, -bound, bound)
    x = jax.random.normal(kx, (batch, seq, attn_size), jnp.float32)

    y = jax.block_until_ready(feed_forward(x, weight, bias))
    y_ref = _reference(x, weight, bias)
    assert y.shape == (batch, seq, ff_size)
    assert jnp.allclose(y, y_ref, atol=2e-3, rtol=2e-3)

    # --- Test 2: non-divisible shapes exercising the multi-tile M/N/K path ---
    batch2, seq2, attn2, ff2 = 2, 160, 600, 520
    kx, kw, kb, key = jax.random.split(key, 4)
    bound2 = 1.0 / (attn2 ** 0.5)
    weight2 = jax.random.uniform(kw, (ff2, attn2), jnp.float32, -bound2, bound2)
    bias2 = jax.random.uniform(kb, (ff2,), jnp.float32, -bound2, bound2)
    x2 = jax.random.normal(kx, (batch2, seq2, attn2), jnp.float32)

    y2 = jax.block_until_ready(feed_forward(x2, weight2, bias2))
    y2_ref = _reference(x2, weight2, bias2)
    assert y2.shape == (batch2, seq2, ff2)
    assert jnp.allclose(y2, y2_ref, atol=2e-3, rtol=2e-3)

    print("KERNEL_OK")
</pallas_src>

<mosaic_0001>
module attributes {stable_mosaic.version = 11 : i64} {
  func.func @ff_kernel(%arg0: i32, %arg1: i32, %arg2: i32, %arg3: memref<16x128xf32, #tpu.memory_space<vmem>>, %arg4: memref<128x128xf32, #tpu.memory_space<vmem>>, %arg5: memref<1x128xf32, #tpu.memory_space<vmem>>, %arg6: memref<16x128xf32, #tpu.memory_space<vmem>>, %arg7: memref<16x128xf32, #tpu.memory_space<vmem>>) attributes {dimension_semantics = [#tpu.dimension_semantics<parallel>, #tpu.dimension_semantics<parallel>, #tpu.dimension_semantics<arbitrary>], iteration_bounds = array<i64: 1, 1, 1>, scalar_prefetch = 0 : i64, scratch_operands = 1 : i64, tpu.core_type = #tpu.core_type<tc>, window_params = [{transform_indices = @transform_0, window_bounds = array<i64: 16, 128>}, {transform_indices = @transform_1, window_bounds = array<i64: 128, 128>}, {transform_indices = @transform_2, window_bounds = array<i64: 1, 128>}, {transform_indices = @transform_3, window_bounds = array<i64: 16, 128>}]} {
    %c0_i32 = arith.constant 0 : i32
    %0 = arith.cmpi eq, %arg2, %c0_i32 : i32
    %1 = arith.extui %0 : i1 to i32
    %c0_i32_0 = arith.constant 0 : i32
    %2 = arith.cmpi ne, %1, %c0_i32_0 : i32
    scf.if %2 {
      %cst_10 = arith.constant 0.000000e+00 : f32
      %12 = vector.broadcast %cst_10 : f32 to vector<16x128xf32>
      %c0_11 = arith.constant 0 : index
      %c0_12 = arith.constant 0 : index
      %13 = vector.load %arg7[%c0_11, %c0_12] : memref<16x128xf32, #tpu.memory_space<vmem>>, vector<16x128xf32>
      tpu.vector_store %arg7[%c0_11, %c0_12], %12 {strides = array<i32>} : memref<16x128xf32, #tpu.memory_space<vmem>>, vector<16x128xf32>,
    } else {
    }
    %c0 = arith.constant 0 : index
    %c0_1 = arith.constant 0 : index
    %3 = vector.load %arg7[%c0, %c0_1] : memref<16x128xf32, #tpu.memory_space<vmem>>, vector<16x128xf32>
    %c0_2 = arith.constant 0 : index
    %c0_3 = arith.constant 0 : index
    %4 = vector.load %arg3[%c0_2, %c0_3] : memref<16x128xf32, #tpu.memory_space<vmem>>, vector<16x128xf32>
    %c0_4 = arith.constant 0 : index
    %c0_5 = arith.constant 0 : index
    %5 = vector.load %arg4[%c0_4, %c0_5] : memref<128x128xf32, #tpu.memory_space<vmem>>, vector<128x128xf32>
    %cst = arith.constant dense<0.000000e+00> : vector<16x128xf32>
    %6 = tpu.matmul %4, %5, %cst {dimension_numbers = #tpu.dot_dimension_numbers<[1], [1], [0], [0], [0, 0, 1, 0], [], []>} : vector<16x128xf32>, vector<128x128xf32>, vector<16x128xf32> -> vector<16x128xf32>
    %7 = arith.addf %3, %6 : vector<16x128xf32>
    %c0_6 = arith.constant 0 : index
    %c0_7 = arith.constant 0 : index
    %8 = vector.load %arg7[%c0_6, %c0_7] : memref<16x128xf32, #tpu.memory_space<vmem>>, vector<16x128xf32>
    tpu.vector_store %arg7[%c0_6, %c0_7], %7 {strides = array<i32>} : memref<16x128xf32, #tpu.memory_space<vmem>>, vector<16x128xf32>,
    %c0_i32_8 = arith.constant 0 : i32
    %9 = arith.cmpi eq, %arg2, %c0_i32_8 : i32
    %10 = arith.extui %9 : i1 to i32
    %c0_i32_9 = arith.constant 0 : i32
    %11 = arith.cmpi ne, %10, %c0_i32_9 : i32
    scf.if %11 {
      %c0_10 = arith.constant 0 : index
      %c0_11 = arith.constant 0 : index
      %12 = vector.load %arg7[%c0_10, %c0_11] : memref<16x128xf32, #tpu.memory_space<vmem>>, vector<16x128xf32>
      %c0_12 = arith.constant 0 : index
      %c0_13 = arith.constant 0 : index
      %13 = vector.load %arg5[%c0_12, %c0_13] : memref<1x128xf32, #tpu.memory_space<vmem>>, vector<1x128xf32>
      %14 = vector.broadcast %13 : vector<1x128xf32> to vector<16x128xf32>
      %15 = arith.addf %12, %14 : vector<16x128xf32>
      %cst_14 = arith.constant 0.000000e+00 : f32
      %16 = vector.broadcast %cst_14 : f32 to vector<16x128xf32>
      %17 = arith.maximumf %15, %16 : vector<16x128xf32>
      %c0_15 = arith.constant 0 : index
      %c0_16 = arith.constant 0 : index
      %18 = vector.load %arg6[%c0_15, %c0_16] : memref<16x128xf32, #tpu.memory_space<vmem>>, vector<16x128xf32>
      tpu.vector_store %arg6[%c0_15, %c0_16], %17 {strides = array<i32>} : memref<16x128xf32, #tpu.memory_space<vmem>>, vector<16x128xf32>,
    } else {
    }
    return
  }
  func.func @transform_0(%arg0: i32, %arg1: i32, %arg2: i32) -> (i32, i32) {
    %c0_i32 = arith.constant 0 : i32
    return %arg0, %arg2 : i32, i32
  }
  func.func @transform_1(%arg0: i32, %arg1: i32, %arg2: i32) -> (i32, i32) {
    %c0_i32 = arith.constant 0 : i32
    return %arg1, %arg2 : i32, i32
  }
  func.func @transform_2(%arg0: i32, %arg1: i32, %arg2: i32) -> (i32, i32) {
    %c0_i32 = arith.constant 0 : i32
    %c0_i32_0 = arith.constant 0 : i32
    return %c0_i32, %arg1 : i32, i32
  }
  func.func @transform_3(%arg0: i32, %arg1: i32, %arg2: i32) -> (i32, i32) {
    %c0_i32 = arith.constant 0 : i32
    return %arg0, %arg1 : i32, i32
  }
}

</mosaic_0001>

<llo_original>
// kernel: feed_forward.1
$region0: #{feed_forward.1}
  #allocation0 [shape = 'u32[]', space=smem, size = 0x4, offset = 0x4, fixed_abs, tag = 'smem constant byte address 0x4 - core index']
  #allocation1 [shape = 'u32[144,128]{1,0:T(1,128)}', space=vmem, size = 0x12000, scoped, tag = 'internal scratch']
  #allocation2 [shape = 'f32[16,128]{1,0:T(8,128)}', space=vmem, size = 0x2000, scoped, tag = 'scratch operand']
  %s0 = inlined_call_operand.vmem [shape: f32[16,128], index: 0, kind: input, shape index: {}]
  %s1 = inlined_call_operand.vmem [shape: f32[128,128], index: 1, kind: input, shape index: {}]
  %s2 = inlined_call_operand.vmem [shape: f32[1,128], index: 2, kind: input, shape index: {}]
  %s3 = inlined_call_operand.vmem [shape: f32[16,128], index: 3, kind: output, shape index: {}]
  %s4 = sld [smem:[#allocation0]]
  $region30: #{feed_forward.1} parent=0
    _
  %s6 = ssub.s32 1, %s4
  %s7 = scalar_select 0, %s6, %s4
  // Predicated region
  $region2: #{feed_forward.1} parent=0 // pred_check
    _
  $region3: #{feed_forward.1} parent=0 // pred_check_branch
    %9 = sbr.rel (0) target = $region5
  $region4: #{feed_forward.1} parent=0 // pred_region
    _
  $region5: #{feed_forward.1} parent=0 // pred_fallthru
    _
  // Predicated region
  $region6: #{feed_forward.1} parent=0 // pred_check
    _
  $region7: #{feed_forward.1} parent=0 // pred_check_branch
    %11 = sbr.rel (0) target = $region9
  $region8: #{feed_forward.1} parent=0 // pred_region
    _
  $region9: #{feed_forward.1} parent=0 // pred_fallthru
    _
  // Predicated region
  $region10: #{feed_forward.1} parent=0 // pred_check
    _
  $region11: #{feed_forward.1} parent=0 // pred_check_branch
    %13 = sbr.rel (0) target = $region13
  $region12: #{feed_forward.1} parent=0 // pred_region
    _
  $region13: #{feed_forward.1} parent=0 // pred_fallthru
    _
  %p14 = scmp.eq.s32.totalorder 0, 0
  // Predicated region
  $region14: #{feed_forward.1} parent=0 // pred_check
    %p15 = pneg %p14
  $region15: #{feed_forward.1} parent=0 // pred_check_branch
    %17 = sbr.rel (%p15) target = $region17
  $region16: #{feed_forward.1} parent=0 // pred_region
    %18 = vst [vmem:[#allocation2] sm:$0xff] 0.0
    %19 = vst [vmem:[#allocation2 + $0x8] sm:$0xff] 0.0
  $region17: #{feed_forward.1} parent=0 // pred_fallthru
    _
  %v20 = vld [vmem:[#allocation2] sm:$0xff]
  %v21 = vld [vmem:[#allocation2 + $0x8] sm:$0xff]
  %v22 = vld [vmem:[%s0] sm:$0xff]
  %v23 = vld [vmem:[%s0 + $0x8] sm:$0xff]
  %v24 = vld [vmem:[%s1] sm:$0xff]
  %v25 = vld [vmem:[%s1 + $0x8] sm:$0xff]
  %v26 = vld [vmem:[%s1 + $0x10] sm:$0xff]
  %v27 = vld [vmem:[%s1 + $0x18] sm:$0xff]
  %v28 = vld [vmem:[%s1 + $0x20] sm:$0xff]
  %v29 = vld [vmem:[%s1 + $0x28] sm:$0xff]
  %v30 = vld [vmem:[%s1 + $0x30] sm:$0xff]
  %v31 = vld [vmem:[%s1 + $0x38] sm:$0xff]
  %v32 = vld [vmem:[%s1 + $0x40] sm:$0xff]
  %v33 = vld [vmem:[%s1 + $0x48] sm:$0xff]
  %v34 = vld [vmem:[%s1 + $0x50] sm:$0xff]
  %v35 = vld [vmem:[%s1 + $0x58] sm:$0xff]
  %v36 = vld [vmem:[%s1 + $0x60] sm:$0xff]
  %v37 = vld [vmem:[%s1 + $0x68] sm:$0xff]
  %v38 = vld [vmem:[%s1 + $0x70] sm:$0xff]
  %v39 = vld [vmem:[%s1 + $0x78] sm:$0xff]
  %40 = vmatprep.subr.mxu0 0.0
  %41 = vmatpush1.xpose.msra.mxu0 %v24
  %42 = vmatprep.subr.mxu0 0.0
  %43 = vmatpush1.xpose.msra.mxu0 %v25
  %44 = vmatprep.subr.mxu0 0.0
  %45 = vmatpush1.xpose.msra.mxu0 %v26
  %46 = vmatprep.subr.mxu0 0.0
  %47 = vmatpush1.xpose.msra.mxu0 %v27
  %48 = vmatprep.subr.mxu0 0.0
  %49 = vmatpush1.xpose.msra.mxu0 %v28
  %50 = vmatprep.subr.mxu0 0.0
  %51 = vmatpush1.xpose.msra.mxu0 %v29
  %52 = vmatprep.subr.mxu0 0.0
  %53 = vmatpush1.xpose.msra.mxu0 %v30
  %54 = vmatprep.subr.mxu0 0.0
  %55 = vmatpush1.xpose.msra.mxu0 %v31
  %56 = vmatprep.subr.mxu0 0.0
  %57 = vmatpush1.xpose.msra.mxu0 %v32
  %58 = vmatprep.subr.mxu0 0.0
  %59 = vmatpush1.xpose.msra.mxu0 %v33
  %60 = vmatprep.subr.mxu0 0.0
  %61 = vmatpush1.xpose.msra.mxu0 %v34
  %62 = vmatprep.subr.mxu0 0.0
  %63 = vmatpush1.xpose.msra.mxu0 %v35
  %64 = vmatprep.subr.mxu0 0.0
  %65 = vmatpush1.xpose.msra.mxu0 %v36
  %66 = vmatprep.subr.mxu0 0.0
  %67 = vmatpush1.xpose.msra.mxu0 %v37
  %68 = vmatprep.subr.mxu0 0.0
  %69 = vmatpush1.xpose.msra.mxu0 %v38
  %70 = vmatprep.subr.mxu0 0.0
  %71 = vmatpush1.xpose.msra.mxu0 %v39
  %72 = vmatprep.subr.mxu0 0.0
  %73 = vmatpush1.xpose.msra.mxu0 0.0
  %74 = vmatprep.subr.mxu0 0.0
  %75 = vmatpush1.xpose.msra.mxu0 0.0
  %76 = vmatprep.subr.mxu0 0.0
  %77 = vmatpush1.xpose.msra.mxu0 0.0
  %78 = vmatprep.subr.mxu0 0.0
  %79 = vmatpush1.xpose.msra.mxu0 0.0
  %80 = vmatprep.subr.mxu0 0.0
  %81 = vmatpush1.xpose.msra.mxu0 0.0
  %82 = vmatprep.subr.mxu0 0.0
  %83 = vmatpush1.xpose.msra.mxu0 0.0
  %84 = vmatprep.subr.mxu0 0.0
  %85 = vmatpush1.xpose.msra.mxu0 0.0
  %86 = vmatprep.subr.mxu0 0.0
  %87 = vmatpush1.xpose.msra.mxu0 0.0
  %88 = vmatprep.subr.mxu0 0.0
  %89 = vmatpush1.xpose.msra.mxu0 0.0
  %90 = vmatprep.subr.mxu0 0.0
  %91 = vmatpush1.xpose.msra.mxu0 0.0
  %92 = vmatprep.subr.mxu0 0.0
  %93 = vmatpush1.xpose.msra.mxu0 0.0
  %94 = vmatprep.subr.mxu0 0.0
  %95 = vmatpush1.xpose.msra.mxu0 0.0
  %96 = vmatprep.subr.mxu0 0.0
  %97 = vmatpush1.xpose.msra.mxu0 0.0
  %98 = vmatprep.subr.mxu0 0.0
  %99 = vmatpush1.xpose.msra.mxu0 0.0
  %100 = vmatprep.subr.mxu0 0.0
  %101 = vmatpush1.xpose.msra.mxu0 0.0
  %102 = vmatprep.subr.mxu0 0.0
  %103 = vmatpush1.xpose.msra.mxu0 0.0
  %104 = vmatprep.mubr.f32.mxu0 0.0
  %105 = vmatmul.mubr.f32.gmra.mrb[0].mxu0 %v22
  %v106 = vpop.f32.mrb[0].mxu0
  %v107 = vadd.f32 0.0, %v106
  %v108 = vpop.f32.mrb[0].mxu0
  %109 = vmatprep.mubr.f32.mxu0 0.0
  %110 = vmatmul.mubr.f32.gmra.mrb[0].mxu0 %v23
  %v111 = vpop.f32.mrb[0].mxu0
  %v112 = vadd.f32 0.0, %v111
  %v113 = vpop.f32.mrb[0].mxu0
  %114 = vdwg.mxu0
  %v115 = vadd.f32 %v20, %v107
  %v116 = vadd.f32 %v21, %v112
  %117 = vst [vmem:[#allocation2] sm:$0xff] %v115
  %118 = vst [vmem:[#allocation2 + $0x8] sm:$0xff] %v116
  // Predicated region
  $region18: #{feed_forward.1} parent=0 // pred_check
    %p119 = pneg %p14
  $region19: #{feed_forward.1} parent=0 // pred_check_branch
    %121 = sbr.rel (%p119) target = $region21
  $region20: #{feed_forward.1} parent=0 // pred_region
    %v122 = vld [vmem:[#allocation2] sm:$0xff]
    %v123 = vld [vmem:[#allocation2 + $0x8] sm:$0xff]
    %v124 = vld [vmem:[%s2] sm:$0x1]
    %v126 = vlaneseq
    %v127 = vshrl.u32 %v126, 7
    %v128 = vsub.s32 0, %v127
    %v129 = vrot.slane %v124, %v128
    %v131 = vadd.f32 %v122, %v129
    %v132 = vadd.f32 %v123, %v129
    %v133 = vmax.f32 %v131, 0.0
    %v134 = vmax.f32 %v132, 0.0
    %135 = vst [vmem:[%s3] sm:$0xff] %v133
    %136 = vst [vmem:[%s3 + $0x8] sm:$0xff] %v134
  $region21: #{feed_forward.1} parent=0 // pred_fallthru
    _
  // Predicated region
  $region22: #{feed_forward.1} parent=0 // pred_check
    _
  $region23: #{feed_forward.1} parent=0 // pred_check_branch
    %138 = sbr.rel (0) target = $region25
  $region24: #{feed_forward.1} parent=0 // pred_region
    _
  $region25: #{feed_forward.1} parent=0 // pred_fallthru
    _
  // Predicated region
  $region26: #{feed_forward.1} parent=0 // pred_check
    _
  $region27: #{feed_forward.1} parent=0 // pred_check_branch
    %140 = sbr.rel (0) target = $region29
  $region28: #{feed_forward.1} parent=0 // pred_region
    _
  $region29: #{feed_forward.1} parent=0 // pred_fallthru
    _

</llo_original>
